<compile_context>
chip_gen: v6e
topology: v6e:2x2x1
jax: 0.10.0
libtpu: 0.0.40
codegen_flags: <defaults>
</compile_context>

<pallas_src>
import functools

import jax
import jax.numpy as jnp
from jax.experimental import pallas as pl
from jax.experimental.pallas import tpu as pltpu

EPS = 1e-5
_MIB = 1024 * 1024


def _round_up(v, m):
    return -(-v // m) * m


# ----------------------------- kernels ---------------------------------------


def gcn_fused_kernel(adj_ref, x_ref, w_ref, gamma_ref, beta_ref, o_ref, *, n_true, eps):
    """Single-tile fast path: both matmuls, BN statistics and normalize in one shot."""
    ax = jnp.dot(adj_ref[...], x_ref[...], preferred_element_type=jnp.float32)
    h = jnp.dot(ax.astype(w_ref.dtype), w_ref[...], preferred_element_type=jnp.float32)
    # Padded adjacency rows are all-zero -> h rows are exactly zero -> they contribute
    # nothing to the sums; divide by the true node count.
    total = jnp.sum(h, axis=0, keepdims=True)
    total_sq = jnp.sum(h * h, axis=0, keepdims=True)
    mean = total / n_true
    var = jnp.maximum(total_sq / n_true - mean * mean, 0.0)
    scale = gamma_ref[...] * jax.lax.rsqrt(var + eps)
    shift = beta_ref[...] - mean * scale
    o_ref[...] = (h * scale + shift).astype(o_ref.dtype)


def gcn_matmul_stats_kernel(adj_ref, x_ref, w_ref, h_ref, sum_ref, sumsq_ref, acc_ref):
    """Pass 1: h_tile = (adj_tile @ x) @ W with K-tiled accumulation + BN partial sums."""
    k = pl.program_id(1)

    @pl.when(k == 0)
    def _init():
        acc_ref[...] = jnp.zeros_like(acc_ref)

    # adj_tile @ x_tile on the MXU, f32 accumulate into VMEM scratch (adj HBM traffic
    # dominates; the accumulator keeps VMEM independent of N).
    acc_ref[...] += jnp.dot(adj_ref[...], x_ref[...], preferred_element_type=jnp.float32)

    @pl.when(k == pl.num_programs(1) - 1)
    def _finalize():
        # Second (small) matmul in matmul_dtype (bf16 by default), f32 accumulate.
        # Bias is NOT added: it cancels under training-mode BatchNorm.
        h = jnp.dot(acc_ref[...].astype(w_ref.dtype), w_ref[...],
                    preferred_element_type=jnp.float32)
        h_ref[...] = h.astype(h_ref.dtype)
        f_out = h.shape[1]
        # Per-tile partial BN statistics from the f32 h (before any bf16 storage cast).
        # Broadcast to an (8, F_out) block => aligned, unmasked lane-dense stores.
        sum_ref[...] = jnp.broadcast_to(jnp.sum(h, axis=0, keepdims=True), (8, f_out))
        sumsq_ref[...] = jnp.broadcast_to(jnp.sum(h * h, axis=0, keepdims=True), (8, f_out))


def gcn_normalize_kernel(h_ref, scale_ref, shift_ref, o_ref):
    """Pass 2: folded BatchNorm affine — one multiply + one add per element."""
    o_ref[...] = (h_ref[...] * scale_ref[...] + shift_ref[...]).astype(o_ref.dtype)


# ----------------------------- wrapper ----------------------------------------


def gcn_layer(x, adj, weight, bias, gamma, beta, *,
              tm=1024, tk=1024, tm_norm=2048,
              matmul_dtype=jnp.bfloat16, h_dtype=jnp.bfloat16,
              eps=EPS, fused=None, fused_max_bytes=12 * _MIB,
              vmem_limit_bytes=None):
    """GCNLayer forward: BatchNorm1d(adj @ x @ W + b) with training-mode BN statistics.

    tm / tk      : pass-1 row / contraction tile (rounded to multiples of 8 / 128).
    tm_norm      : pass-2 (normalize) row tile — pure streaming FMA, so keep it large.
    matmul_dtype : dtype of adj / x / W fed to the MXU (bf16 default; f32 for strict checks).
    h_dtype      : storage dtype of the intermediate h (bf16 default).
    fused        : None = auto fast path for small graphs; False = force two-pass K-tiled.
    """
    del bias  # Cancels analytically under training-mode BatchNorm (only shifts the mean).

    n, f_in = x.shape
    f_out = weight.shape[1]
    out_dtype = jnp.float32

    # Pad the contraction dim F_in to a multiple of 128 (lane / MXU width).
    f_in_pad = _round_up(f_in, 128)
    if f_in_pad != f_in:
        x = jnp.pad(x, ((0, 0), (0, f_in_pad - f_in)))
        weight = jnp.pad(weight, ((0, f_in_pad - f_in), (0, 0)))

    msize = jnp.dtype(matmul_dtype).itemsize
    hsize = jnp.dtype(h_dtype).itemsize

    w_c = weight.astype(matmul_dtype)
    gamma_f32 = gamma.astype(jnp.float32)
    beta_f32 = beta.astype(jnp.float32)

    # ---- single-tile fused fast path decision ----
    n_rows_small = _round_up(n, 8)
    n_cols_small = _round_up(n, 128)
    fused_bytes = (n_rows_small * n_cols_small * msize      # adj
                   + n_cols_small * f_in_pad * msize        # x
                   + f_in_pad * f_out * msize                # W
                   + n_rows_small * f_in_pad * 4             # ax (f32 temp)
                   + 2 * n_rows_small * f_out * 4)           # h + out (f32)
    if fused is None:
        fused = fused_bytes <= fused_max_bytes

    if fused:
        n_rows_pad, n_cols_pad = n_rows_small, n_cols_small
        if n_rows_pad != n or n_cols_pad != n:
            adj = jnp.pad(adj, ((0, n_rows_pad - n), (0, n_cols_pad - n)))
        if n_cols_pad != n:
            x = jnp.pad(x, ((0, n_cols_pad - n), (0, 0)))
        adj_c = adj.astype(matmul_dtype)
        x_c = x.astype(matmul_dtype)

        limit = vmem_limit_bytes
        if limit is None:
            limit = min(56 * _MIB, max(32 * _MIB, 2 * fused_bytes + 8 * _MIB))

        out = pl.pallas_call(
            functools.partial(gcn_fused_kernel, n_true=n, eps=eps),
            out_shape=jax.ShapeDtypeStruct((n_rows_pad, f_out), out_dtype),
            grid_spec=pltpu.PrefetchScalarGridSpec(
                num_scalar_prefetch=0,
                grid=(1,),
                in_specs=[
                    pl.BlockSpec((n_rows_pad, n_cols_pad), lambda i: (0, 0)),
                    pl.BlockSpec((n_cols_pad, f_in_pad), lambda i: (0, 0)),
                    pl.BlockSpec((f_in_pad, f_out), lambda i: (0, 0)),
                    pl.BlockSpec((1, f_out), lambda i: (0, 0)),
                    pl.BlockSpec((1, f_out), lambda i: (0, 0)),
                ],
                out_specs=pl.BlockSpec((n_rows_pad, f_out), lambda i: (0, 0)),
            ),
            compiler_params=pltpu.CompilerParams(
                dimension_semantics=("arbitrary",),
                vmem_limit_bytes=int(limit)),
        )(adj_c, x_c, w_c, gamma_f32.reshape(1, f_out), beta_f32.reshape(1, f_out))
        return out[:n]

    # ---- scalable two-pass path ----
    # Clamp / align tiles: tm multiple of 8 (sublane), tk multiple of 128 (lane).
    tm = max(8, min(_round_up(tm, 8), _round_up(n, 8)))
    tk = max(128, min(_round_up(tk, 128), _round_up(n, 128)))
    n_rows_pad = _round_up(n, tm)
    n_cols_pad = _round_up(n, tk)
    num_row_tiles = n_rows_pad // tm          # ideally >= 2 and even for v7x megacore
    num_k_tiles = n_cols_pad // tk

    if n_rows_pad != n or n_cols_pad != n:
        # Zero adj rows -> zero h rows -> no effect on BN sums; sliced off at the end.
        # Zero adj cols x zero x rows -> no effect on the accumulation.
        adj = jnp.pad(adj, ((0, n_rows_pad - n), (0, n_cols_pad - n)))
    if n_cols_pad != n:
        x = jnp.pad(x, ((0, n_cols_pad - n), (0, 0)))
    adj_c = adj.astype(matmul_dtype)
    x_c = x.astype(matmul_dtype)

    # Pass-2 tile (decoupled, much larger; uneven trailing block is handled by Pallas).
    tm2 = max(8, min(_round_up(tm_norm, 8), n_rows_pad))
    grid2 = pl.cdiv(n_rows_pad, tm2)

    # VMEM footprint -> vmem_limit sized from the tiles (capped for v7x's 64 MiB VMEM).
    pass1_bytes = (2 * tm * tk * msize              # adj, double-buffered
                   + 2 * tk * f_in_pad * msize      # x,   double-buffered
                   + f_in_pad * f_out * msize       # W,   single-buffered
                   + tm * f_in_pad * 4              # f32 accumulator scratch
                   + 2 * tm * f_out * hsize         # h output, double-buffered
                   + 4 * 8 * f_out * 4)             # stats outputs
    pass2_bytes = 2 * tm2 * f_out * (hsize + 4) + 4 * f_out * 4
    limit = vmem_limit_bytes
    if limit is None:
        limit = min(56 * _MIB,
                    max(32 * _MIB, int(1.5 * max(pass1_bytes, pass2_bytes)) + 8 * _MIB))
    limit = int(limit)

    cparams1 = pltpu.CompilerParams(
        # Rows shard across v7x TensorCores; K is the trailing accumulation axis.
        dimension_semantics=("parallel", "arbitrary"),
        vmem_limit_bytes=limit)

    def _pass1(w_spec):
        return pl.pallas_call(
            gcn_matmul_stats_kernel,
            out_shape=(
                jax.ShapeDtypeStruct((n_rows_pad, f_out), h_dtype),
                jax.ShapeDtypeStruct((num_row_tiles * 8, f_out), jnp.float32),
                jax.ShapeDtypeStruct((num_row_tiles * 8, f_out), jnp.float32),
            ),
            grid_spec=pltpu.PrefetchScalarGridSpec(
                num_scalar_prefetch=0,
                grid=(num_row_tiles, num_k_tiles),
                in_specs=[
                    pl.BlockSpec((tm, tk), lambda i, k: (i, k)),          # adj tile
                    pl.BlockSpec((tk, f_in_pad), lambda i, k: (k, 0)),    # x tile
                    w_spec,                                               # W (invariant)
                ],
                out_specs=(
                    pl.BlockSpec((tm, f_out), lambda i, k: (i, 0)),       # h row tile
                    pl.BlockSpec((8, f_out), lambda i, k: (i, 0)),        # partial sum
                    pl.BlockSpec((8, f_out), lambda i, k: (i, 0)),        # partial sum sq
                ),
                scratch_shapes=[pltpu.VMEM((tm, f_in_pad), jnp.float32)],
            ),
            compiler_params=cparams1,
        )(adj_c, x_c, w_c)

    try:
        # Single-buffer the grid-invariant W block (it is never re-fetched, so the second
        # buffer would be pure VMEM waste — matters most under v7x's 64 MiB budget).
        w_spec = pl.BlockSpec((f_in_pad, f_out), lambda i, k: (0, 0),
                              pipeline_mode=pl.Buffered(1))
        h, part_sum, part_sumsq = jax.block_until_ready(_pass1(w_spec))
    except Exception:  # Fallback for JAX builds that reject pipeline_mode on pallas_call.
        w_spec = pl.BlockSpec((f_in_pad, f_out), lambda i, k: (0, 0))
        h, part_sum, part_sumsq = _pass1(w_spec)

    # ---- tiny XLA-side reduction of per-tile stats -> folded BN scale / shift ----
    total = part_sum[::8, :].sum(axis=0)          # each tile wrote its partial sum 8x
    total_sq = part_sumsq[::8, :].sum(axis=0)
    mean = total / n                              # true (unpadded) node count
    var = jnp.maximum(total_sq / n - mean * mean, 0.0)   # biased variance (training BN)
    scale = gamma_f32 * jax.lax.rsqrt(var + eps)
    shift = beta_f32 - mean * scale

    # ---- pass 2: streaming normalize with a big row tile; alias output onto h ----
    alias = {0: 0} if jnp.dtype(h_dtype) == jnp.dtype(out_dtype) else {}
    out = pl.pallas_call(
        gcn_normalize_kernel,
        out_shape=jax.ShapeDtypeStruct((n_rows_pad, f_out), out_dtype),
        grid_spec=pltpu.PrefetchScalarGridSpec(
            num_scalar_prefetch=0,
            grid=(grid2,),
            in_specs=[
                pl.BlockSpec((tm2, f_out), lambda i: (i, 0)),
                pl.BlockSpec((1, f_out), lambda i: (0, 0)),
                pl.BlockSpec((1, f_out), lambda i: (0, 0)),
            ],
            out_specs=pl.BlockSpec((tm2, f_out), lambda i: (i, 0)),
        ),
        input_output_aliases=alias,
        compiler_params=pltpu.CompilerParams(
            dimension_semantics=("parallel",),
            vmem_limit_bytes=limit),
    )(h, scale.reshape(1, f_out), shift.reshape(1, f_out))

    return out[:n]


# ----------------------------- reference & test -------------------------------


def gcn_reference(x, adj, weight, bias, gamma, beta, eps=EPS):
    h = adj @ x
    h = h @ weight + bias
    mean = jnp.mean(h, axis=0, keepdims=True)
    var = jnp.mean((h - mean) ** 2, axis=0, keepdims=True)
    return (h - mean) / jnp.sqrt(var + eps) * gamma + beta


if __name__ == "__main__":
    N, in_features, out_features = 256, 32, 128

    key = jax.random.PRNGKey(0)
    k_x, k_adj, k_w = jax.random.split(key, 3)

    # Node features.
    x = jax.random.normal(k_x, (N, in_features), dtype=jnp.float32)

    # Synthetic symmetric-normalized adjacency with self loops (dense — torch.sparse.mm's
    # sparsity is not exploited here).
    a = (jax.random.uniform(k_adj, (N, N)) < 0.1).astype(jnp.float32)
    a = jnp.maximum(a, a.T) + jnp.eye(N, dtype=jnp.float32)
    deg = jnp.sum(a, axis=1)
    d_inv_sqrt = 1.0 / jnp.sqrt(deg)
    adj = a * d_inv_sqrt[:, None] * d_inv_sqrt[None, :]

    # Parameters: kaiming_uniform_-style weight, zero bias, BN affine gamma=1, beta=0.
    bound = (6.0 / out_features) ** 0.5
    weight = jax.random.uniform(
        k_w, (in_features, out_features), minval=-bound, maxval=bound, dtype=jnp.float32)
    bias = jnp.zeros((out_features,), dtype=jnp.float32)
    gamma = jnp.ones((out_features,), dtype=jnp.float32)
    beta = jnp.zeros((out_features,), dtype=jnp.float32)

    ref = gcn_reference(x, adj, weight, bias, gamma, beta)

    # 1) Fused single-tile fast path, full precision: strict check.
    out_fused_f32 = jax.block_until_ready(
        gcn_layer(x, adj, weight, bias, gamma, beta,
                  matmul_dtype=jnp.float32, h_dtype=jnp.float32))
    assert out_fused_f32.shape == (N, out_features)
    assert jnp.allclose(out_fused_f32, ref, atol=5e-3, rtol=5e-3)

    # 2) Forced two-pass K-tiled path, full precision (exercises the accumulator grid,
    #    cross-tile BN stats and the aliased normalize pass): strict check.
    out_tiled_f32 = jax.block_until_ready(
        gcn_layer(x, adj, weight, bias, gamma, beta, fused=False,
                  tm=128, tk=128, tm_norm=256,
                  matmul_dtype=jnp.float32, h_dtype=jnp.float32))
    assert jnp.allclose(out_tiled_f32, ref, atol=5e-3, rtol=5e-3)

    # 3) Default bf16 path (fused fast path is auto-selected at this size).  bf16 adj/x/W
    #    and bf16 intermediates are an intentional bandwidth/accuracy tradeoff.
    out_bf16 = jax.block_until_ready(gcn_layer(x, adj, weight, bias, gamma, beta))
    assert out_bf16.shape == (N, out_features)
    assert jnp.allclose(out_bf16, ref, atol=1e-1, rtol=1e-1)

    # 4) Forced two-pass bf16 path with bf16 intermediate h.
    out_tiled_bf16 = jax.block_until_ready(
        gcn_layer(x, adj, weight, bias, gamma, beta, fused=False, tm=128, tk=128))
    assert jnp.allclose(out_tiled_bf16, ref, atol=1e-1, rtol=1e-1)

    print("KERNEL_OK")
</pallas_src>

<mosaic_0001>
module attributes {stable_mosaic.version = 11 : i64} {
  func.func @gcn_fused_kernel(%arg0: i32, %arg1: memref<256x256xf32, #tpu.memory_space<vmem>>, %arg2: memref<256x128xf32, #tpu.memory_space<vmem>>, %arg3: memref<128x128xf32, #tpu.memory_space<vmem>>, %arg4: memref<1x128xf32, #tpu.memory_space<vmem>>, %arg5: memref<1x128xf32, #tpu.memory_space<vmem>>, %arg6: memref<256x128xf32, #tpu.memory_space<vmem>>) attributes {dimension_semantics = [#tpu.dimension_semantics<arbitrary>], iteration_bounds = array<i64: 1>, scalar_prefetch = 0 : i64, scratch_operands = 0 : i64, tpu.core_type = #tpu.core_type<tc>, window_params = [{pipeline_mode = #tpu.pipeline_mode<synchronous>, transform_indices = @transform_0, window_bounds = array<i64: 256, 256>}, {pipeline_mode = #tpu.pipeline_mode<synchronous>, transform_indices = @transform_1, window_bounds = array<i64: 256, 128>}, {pipeline_mode = #tpu.pipeline_mode<synchronous>, transform_indices = @transform_2, window_bounds = array<i64: 128, 128>}, {pipeline_mode = #tpu.pipeline_mode<synchronous>, transform_indices = @transform_3, window_bounds = array<i64: 1, 128>}, {pipeline_mode = #tpu.pipeline_mode<synchronous>, transform_indices = @transform_4, window_bounds = array<i64: 1, 128>}, {pipeline_mode = #tpu.pipeline_mode<synchronous>, transform_indices = @transform_5, window_bounds = array<i64: 256, 128>}]} {
    %c0 = arith.constant 0 : index
    %c0_0 = arith.constant 0 : index
    %0 = vector.load %arg1[%c0, %c0_0] : memref<256x256xf32, #tpu.memory_space<vmem>>, vector<256x256xf32>
    %c0_1 = arith.constant 0 : index
    %c0_2 = arith.constant 0 : index
    %1 = vector.load %arg2[%c0_1, %c0_2] : memref<256x128xf32, #tpu.memory_space<vmem>>, vector<256x128xf32>
    %cst = arith.constant dense<0.000000e+00> : vector<256x128xf32>
    %2 = tpu.matmul %0, %1, %cst {dimension_numbers = #tpu.dot_dimension_numbers<[1], [0], [0], [1], [0, 0, 1, 1], [], []>} : vector<256x256xf32>, vector<256x128xf32>, vector<256x128xf32> -> vector<256x128xf32>
    %c0_3 = arith.constant 0 : index
    %c0_4 = arith.constant 0 : index
    %3 = vector.load %arg3[%c0_3, %c0_4] : memref<128x128xf32, #tpu.memory_space<vmem>>, vector<128x128xf32>
    %cst_5 = arith.constant dense<0.000000e+00> : vector<256x128xf32>
    %4 = tpu.matmul %2, %3, %cst_5 {dimension_numbers = #tpu.dot_dimension_numbers<[1], [0], [0], [1], [0, 0, 1, 1], [], []>} : vector<256x128xf32>, vector<128x128xf32>, vector<256x128xf32> -> vector<256x128xf32>
    %cst_6 = arith.constant dense<0.000000e+00> : vector<128xf32>
    %5 = vector.multi_reduction <add>, %4, %cst_6 [0] : vector<256x128xf32> to vector<128xf32>
    %6 = vector.shape_cast %5 : vector<128xf32> to vector<1x128xf32>
    %7 = arith.mulf %4, %4 : vector<256x128xf32>
    %cst_7 = arith.constant dense<0.000000e+00> : vector<128xf32>
    %8 = vector.multi_reduction <add>, %7, %cst_7 [0] : vector<256x128xf32> to vector<128xf32>
    %9 = vector.shape_cast %8 : vector<128xf32> to vector<1x128xf32>
    %cst_8 = arith.constant 2.560000e+02 : f32
    %10 = vector.broadcast %cst_8 : f32 to vector<1x128xf32>
    %11 = arith.divf %6, %10 : vector<1x128xf32>
    %cst_9 = arith.constant 2.560000e+02 : f32
    %12 = vector.broadcast %cst_9 : f32 to vector<1x128xf32>
    %13 = arith.divf %9, %12 : vector<1x128xf32>
    %14 = arith.mulf %11, %11 : vector<1x128xf32>
    %15 = arith.subf %13, %14 : vector<1x128xf32>
    %cst_10 = arith.constant 0.000000e+00 : f32
    %16 = vector.broadcast %cst_10 : f32 to vector<1x128xf32>
    %17 = arith.maximumf %15, %16 : vector<1x128xf32>
    %c0_11 = arith.constant 0 : index
    %c0_12 = arith.constant 0 : index
    %18 = vector.load %arg4[%c0_11, %c0_12] : memref<1x128xf32, #tpu.memory_space<vmem>>, vector<1x128xf32>
    %cst_13 = arith.constant 9.99999974E-6 : f32
    %19 = vector.broadcast %cst_13 : f32 to vector<1x128xf32>
    %20 = arith.addf %17, %19 : vector<1x128xf32>
    %21 = math.rsqrt %20 : vector<1x128xf32>
    %22 = arith.mulf %18, %21 : vector<1x128xf32>
    %c0_14 = arith.constant 0 : index
    %c0_15 = arith.constant 0 : index
    %23 = vector.load %arg5[%c0_14, %c0_15] : memref<1x128xf32, #tpu.memory_space<vmem>>, vector<1x128xf32>
    %24 = arith.mulf %11, %22 : vector<1x128xf32>
    %25 = arith.subf %23, %24 : vector<1x128xf32>
    %26 = vector.broadcast %22 : vector<1x128xf32> to vector<256x128xf32>
    %27 = arith.mulf %4, %26 : vector<256x128xf32>
    %28 = vector.broadcast %25 : vector<1x128xf32> to vector<256x128xf32>
    %29 = arith.addf %27, %28 : vector<256x128xf32>
    %c0_16 = arith.constant 0 : index
    %c0_17 = arith.constant 0 : index
    %30 = vector.load %arg6[%c0_16, %c0_17] : memref<256x128xf32, #tpu.memory_space<vmem>>, vector<256x128xf32>
    tpu.vector_store %arg6[%c0_16, %c0_17], %29 {strides = array<i32>} : memref<256x128xf32, #tpu.memory_space<vmem>>, vector<256x128xf32>,
    return
  }
  func.func @transform_0(%arg0: i32) -> (i32, i32) {
    %c0_i32 = arith.constant 0 : i32
    %c0_i32_0 = arith.constant 0 : i32
    %c0_i32_1 = arith.constant 0 : i32
    return %c0_i32, %c0_i32_0 : i32, i32
  }
  func.func @transform_1(%arg0: i32) -> (i32, i32) {
    %c0_i32 = arith.constant 0 : i32
    %c0_i32_0 = arith.constant 0 : i32
    %c0_i32_1 = arith.constant 0 : i32
    return %c0_i32, %c0_i32_0 : i32, i32
  }
  func.func @transform_2(%arg0: i32) -> (i32, i32) {
    %c0_i32 = arith.constant 0 : i32
    %c0_i32_0 = arith.constant 0 : i32
    %c0_i32_1 = arith.constant 0 : i32
    return %c0_i32, %c0_i32_0 : i32, i32
  }
  func.func @transform_3(%arg0: i32) -> (i32, i32) {
    %c0_i32 = arith.constant 0 : i32
    %c0_i32_0 = arith.constant 0 : i32
    %c0_i32_1 = arith.constant 0 : i32
    return %c0_i32, %c0_i32_0 : i32, i32
  }
  func.func @transform_4(%arg0: i32) -> (i32, i32) {
    %c0_i32 = arith.constant 0 : i32
    %c0_i32_0 = arith.constant 0 : i32
    %c0_i32_1 = arith.constant 0 : i32
    return %c0_i32, %c0_i32_0 : i32, i32
  }
  func.func @transform_5(%arg0: i32) -> (i32, i32) {
    %c0_i32 = arith.constant 0 : i32
    %c0_i32_0 = arith.constant 0 : i32
    %c0_i32_1 = arith.constant 0 : i32
    return %c0_i32, %c0_i32_0 : i32, i32
  }
}

</mosaic_0001>

<llo_original>
// kernel: tpu_custom_call.1
$region0: #{tpu_custom_call.1}
  #allocation0 [shape = 'u32[]', space=smem, size = 0x4, offset = 0x4, fixed_abs, tag = 'smem constant byte address 0x4 - core index']
  #allocation1 [shape = 'u32[144,128]{1,0:T(1,128)}', space=vmem, size = 0x12000, scoped, tag = 'internal scratch']
  %s0 = inlined_call_operand.hbm [shape: f32[256,256], index: 0, kind: input, shape index: {}]
  %s1 = inlined_call_operand.hbm [shape: f32[256,128], index: 1, kind: input, shape index: {}]
  %s2 = inlined_call_operand.hbm [shape: f32[128,128], index: 2, kind: input, shape index: {}]
  %s3 = inlined_call_operand.vmem [shape: f32[1,128], index: 3, kind: input, shape index: {}]
  %s4 = inlined_call_operand.vmem [shape: f32[1,128], index: 4, kind: input, shape index: {}]
  %s5 = inlined_call_operand.hbm [shape: f32[256,128], index: 5, kind: output, shape index: {}]
  %s6 = sld [smem:[#allocation0]]
  $region42: #{tpu_custom_call.1} parent=0
    _
  %s8 = ssub.s32 1, %s6
  %s9 = scalar_select 0, %s8, %s6
  $region1: #{tpu_custom_call.1} parent=0
    #allocation2 [shape = 'u8[262144]{0}', space=vmem, size = 0x40000, scoped, tag = 'input window, operand 0, single buffered']
    #allocation3 [shape = 's32[1]{0}', space=sflag, size = 0x4, scoped, tag = 'scoped memory for tpu_custom_call.1']
    #allocation4 [shape = 's32[1]{0}', space=sflag, size = 0x4, scoped, tag = 'scoped memory for tpu_custom_call.1']
    #allocation5 [shape = 'u8[131072]{0}', space=vmem, size = 0x20000, scoped, tag = 'input window, operand 1, single buffered']
    #allocation6 [shape = 's32[1]{0}', space=sflag, size = 0x4, scoped, tag = 'scoped memory for tpu_custom_call.1']
    #allocation7 [shape = 'u8[65536]{0}', space=vmem, size = 0x10000, scoped, tag = 'input window, operand 2, single buffered']
    #allocation8 [shape = 'u8[131072]{0}', space=vmem, size = 0x20000, scoped, tag = 'output window, operand 0, single buffered']
    %10 = vsyncpa [#allocation3], 0
    %11 = vsyncpa [#allocation6], 0
    %12 = vsyncpa [#allocation4], 0
    // Predicated region
    $region2: #{tpu_custom_call.1} parent=1 // pred_check
      _
    $region3: #{tpu_custom_call.1} parent=1 // pred_check_branch
      %14 = sbr.rel (0) target = $region5
    $region4: #{tpu_custom_call.1} parent=1 // pred_region
      %s16 = ssub.s32 8192, 8192
      %17 = vsyncadd [#allocation3], %s16
      %s18 = sshll.u32 [#allocation2], 4
      %s19 = int_to_ptr.vmem [resolvable:$true] %s18
      %24 = dma.hbm_to_vmem [thread:$0]  %s0, 8192, %s19, [#allocation3], 256, 256, 16
    $region5: #{tpu_custom_call.1} parent=1 // pred_fallthru
      _
    // Predicated region
    $region6: #{tpu_custom_call.1} parent=1 // pred_check
      _
    $region7: #{tpu_custom_call.1} parent=1 // pred_check_branch
      %26 = sbr.rel (0) target = $region9
    $region8: #{tpu_custom_call.1} parent=1 // pred_region
      %s28 = ssub.s32 4096, 4096
      %29 = vsyncadd [#allocation6], %s28
      %s30 = sshll.u32 [#allocation5], 4
      %s31 = int_to_ptr.vmem [resolvable:$true] %s30
      %36 = dma.hbm_to_vmem [thread:$0]  %s1, 4096, %s31, [#allocation6], 128, 128, 8
    $region9: #{tpu_custom_call.1} parent=1 // pred_fallthru
      _
    // Predicated region
    $region10: #{tpu_custom_call.1} parent=1 // pred_check
      _
    $region11: #{tpu_custom_call.1} parent=1 // pred_check_branch
      %38 = sbr.rel (0) target = $region13
    $region12: #{tpu_custom_call.1} parent=1 // pred_region
      %s40 = ssub.s32 2048, 2048
      %41 = vsyncadd [#allocation6], %s40
      %s42 = sshll.u32 [#allocation7], 4
      %s43 = int_to_ptr.vmem [resolvable:$true] %s42
      %48 = dma.hbm_to_vmem [thread:$0]  %s2, 2048, %s43, [#allocation6], 128, 128, 8
    $region13: #{tpu_custom_call.1} parent=1 // pred_fallthru
      _
    // Predicated region
    $region14: #{tpu_custom_call.1} parent=1 // pred_check
      _
    $region15: #{tpu_custom_call.1} parent=1 // pred_check_branch
      %50 = sbr.rel (0) target = $region17
    $region16: #{tpu_custom_call.1} parent=1 // pred_region
      _
    $region17: #{tpu_custom_call.1} parent=1 // pred_fallthru
      _
    // Predicated region
    $region18: #{tpu_custom_call.1} parent=1 // pred_check
      _
    $region19: #{tpu_custom_call.1} parent=1 // pred_check_branch
      %52 = sbr.rel (0) target = $region21
    $region20: #{tpu_custom_call.1} parent=1 // pred_region
      _
    $region21: #{tpu_custom_call.1} parent=1 // pred_fallthru
      _
    // Predicated region
    $region22: #{tpu_custom_call.1} parent=1 // pred_check
      _
    $region23: #{tpu_custom_call.1} parent=1 // pred_check_branch
      %54 = sbr.rel (0) target = $region25
    $region24: #{tpu_custom_call.1} parent=1 // pred_region
      %55 = dma.done [#allocation3], 8192
    $region25: #{tpu_custom_call.1} parent=1 // pred_fallthru
      _
    // Predicated region
    $region26: #{tpu_custom_call.1} parent=1 // pred_check
      _
    $region27: #{tpu_custom_call.1} parent=1 // pred_check_branch
      %57 = sbr.rel (0) target = $region29
    $region28: #{tpu_custom_call.1} parent=1 // pred_region
      %58 = dma.done [#allocation6], 4096
    $region29: #{tpu_custom_call.1} parent=1 // pred_fallthru
      _
    // Predicated region
    $region30: #{tpu_custom_call.1} parent=1 // pred_check
      _
    $region31: #{tpu_custom_call.1} parent=1 // pred_check_branch
      %60 = sbr.rel (0) target = $region33
    $region32: #{tpu_custom_call.1} parent=1 // pred_region
      %61 = dma.done [#allocation6], 2048
    $region33: #{tpu_custom_call.1} parent=1 // pred_fallthru
      _
    %v62 = vld [vmem:[#allocation2] sm:$0xff]
    %v63 = vld [vmem:[#allocation2 + $0x8] sm:$0xff]
    %v64 = vld [vmem:[#allocation2 + $0x10] sm:$0xff]
    %v65 = vld [vmem:[#allocation2 + $0x18] sm:$0xff]
    %v66 = vld [vmem:[#allocation2 + $0x20] sm:$0xff]
    %v67 = vld [vmem:[#allocation2 + $0x28] sm:$0xff]
    %v68 = vld [vmem:[#allocation2 + $0x30] sm:$0xff]
    %v69 = vld [vmem:[#allocation2 + $0x38] sm:$0xff]
    %v70 = vld [vmem:[#allocation2 + $0x40] sm:$0xff]
    %v71 = vld [vmem:[#allocation2 + $0x48] sm:$0xff]
    %v72 = vld [vmem:[#allocation2 + $0x50] sm:$0xff]
    %v73 = vld [vmem:[#allocation2 + $0x58] sm:$0xff]
    %v74 = vld [vmem:[#allocation2 + $0x60] sm:$0xff]
    %v75 = vld [vmem:[#allocation2 + $0x68] sm:$0xff]
    %v76 = vld [vmem:[#allocation2 + $0x70] sm:$0xff]
    %v77 = vld [vmem:[#allocation2 + $0x78] sm:$0xff]
    %v78 = vld [vmem:[#allocation2 + $0x80] sm:$0xff]
    %v79 = vld [vmem:[#allocation2 + $0x88] sm:$0xff]
    %v80 = vld [vmem:[#allocation2 + $0x90] sm:$0xff]
    %v81 = vld [vmem:[#allocation2 + $0x98] sm:$0xff]
    %v82 = vld [vmem:[#allocation2 + $0xa0] sm:$0xff]
    %v83 = vld [vmem:[#allocation2 + $0xa8] sm:$0xff]
    %v84 = vld [vmem:[#allocation2 + $0xb0] sm:$0xff]
    %v85 = vld [vmem:[#allocation2 + $0xb8] sm:$0xff]
    %v86 = vld [vmem:[#allocation2 + $0xc0] sm:$0xff]
    %v87 = vld [vmem:[#allocation2 + $0xc8] sm:$0xff]
    %v88 = vld [vmem:[#allocation2 + $0xd0] sm:$0xff]
    %v89 = vld [vmem:[#allocation2 + $0xd8] sm:$0xff]
    %v90 = vld [vmem:[#allocation2 + $0xe0] sm:$0xff]
    %v91 = vld [vmem:[#allocation2 + $0xe8] sm:$0xff]
    %v92 = vld [vmem:[#allocation2 + $0xf0] sm:$0xff]
    %v93 = vld [vmem:[#allocation2 + $0xf8] sm:$0xff]
    %v94 = vld [vmem:[#allocation2 + $0x100] sm:$0xff]
    %v95 = vld [vmem:[#allocation2 + $0x108] sm:$0xff]
    %v96 = vld [vmem:[#allocation2 + $0x110] sm:$0xff]
    %v97 = vld [vmem:[#allocation2 + $0x118] sm:$0xff]
    %v98 = vld [vmem:[#allocation2 + $0x120] sm:$0xff]
    %v99 = vld [vmem:[#allocation2 + $0x128] sm:$0xff]
    %v100 = vld [vmem:[#allocation2 + $0x130] sm:$0xff]
    %v101 = vld [vmem:[#allocation2 + $0x138] sm:$0xff]
    %v102 = vld [vmem:[#allocation2 + $0x140] sm:$0xff]
    %v103 = vld [vmem:[#allocation2 + $0x148] sm:$0xff]
    %v104 = vld [vmem:[#allocation2 + $0x150] sm:$0xff]
    %v105 = vld [vmem:[#allocation2 + $0x158] sm:$0xff]
    %v106 = vld [vmem:[#allocation2 + $0x160] sm:$0xff]
    %v107 = vld [vmem:[#allocation2 + $0x168] sm:$0xff]
    %v108 = vld [vmem:[#allocation2 + $0x170] sm:$0xff]
    %v109 = vld [vmem:[#allocation2 + $0x178] sm:$0xff]
    %v110 = vld [vmem:[#allocation2 + $0x180] sm:$0xff]
    %v111 = vld [vmem:[#allocation2 + $0x188] sm:$0xff]
    %v112 = vld [vmem:[#allocation2 + $0x190] sm:$0xff]
    %v113 = vld [vmem:[#allocation2 + $0x198] sm:$0xff]
    %v114 = vld [vmem:[#allocation2 + $0x1a0] sm:$0xff]
    %v115 = vld [vmem:[#allocation2 + $0x1a8] sm:$0xff]
    %v116 = vld [vmem:[#allocation2 + $0x1b0] sm:$0xff]
    %v117 = vld [vmem:[#allocation2 + $0x1b8] sm:$0xff]
    %v118 = vld [vmem:[#allocation2 + $0x1c0] sm:$0xff]
    %v119 = vld [vmem:[#allocation2 + $0x1c8] sm:$0xff]
    %v120 = vld [vmem:[#allocation2 + $0x1d0] sm:$0xff]
    %v121 = vld [vmem:[#allocation2 + $0x1d8] sm:$0xff]
    %v122 = vld [vmem:[#allocation2 + $0x1e0] sm:$0xff]
    %v123 = vld [vmem:[#allocation2 + $0x1e8] sm:$0xff]
    %v124 = vld [vmem:[#allocation2 + $0x1f0] sm:$0xff]
    %v125 = vld [vmem:[#allocation2 + $0x1f8] sm:$0xff]
    %v126 = vld [vmem:[#allocation5] sm:$0xff]
    %v127 = vld [vmem:[#allocation5 + $0x8] sm:$0xff]
    %v128 = vld [vmem:[#allocation5 + $0x10] sm:$0xff]
    %v129 = vld [vmem:[#allocation5 + $0x18] sm:$0xff]
    %v130 = vld [vmem:[#allocation5 + $0x20] sm:$0xff]
    %v131 = vld [vmem:[#allocation5 + $0x28] sm:$0xff]
    %v132 = vld [vmem:[#allocation5 + $0x30] sm:$0xff]
    %v133 = vld [vmem:[#allocation5 + $0x38] sm:$0xff]
    %v134 = vld [vmem:[#allocation5 + $0x40] sm:$0xff]
    %v135 = vld [vmem:[#allocation5 + $0x48] sm:$0xff]
    %v136 = vld [vmem:[#allocation5 + $0x50] sm:$0xff]
    %v137 = vld [vmem:[#allocation5 + $0x58] sm:$0xff]
    %v138 = vld [vmem:[#allocation5 + $0x60] sm:$0xff]
    %v139 = vld [vmem:[#allocation5 + $0x68] sm:$0xff]
    %v140 = vld [vmem:[#allocation5 + $0x70] sm:$0xff]
    %v141 = vld [vmem:[#allocation5 + $0x78] sm:$0xff]
    %v142 = vld [vmem:[#allocation5 + $0x80] sm:$0xff]
    %v143 = vld [vmem:[#allocation5 + $0x88] sm:$0xff]
    %v144 = vld [vmem:[#allocation5 + $0x90] sm:$0xff]
    %v145 = vld [vmem:[#allocation5 + $0x98] sm:$0xff]
    %v146 = vld [vmem:[#allocation5 + $0xa0] sm:$0xff]
    %v147 = vld [vmem:[#allocation5 + $0xa8] sm:$0xff]
    %v148 = vld [vmem:[#allocation5 + $0xb0] sm:$0xff]
    %v149 = vld [vmem:[#allocation5 + $0xb8] sm:$0xff]
    %v150 = vld [vmem:[#allocation5 + $0xc0] sm:$0xff]
    %v151 = vld [vmem:[#allocation5 + $0xc8] sm:$0xff]
    %v152 = vld [vmem:[#allocation5 + $0xd0] sm:$0xff]
    %v153 = vld [vmem:[#allocation5 + $0xd8] sm:$0xff]
    %v154 = vld [vmem:[#allocation5 + $0xe0] sm:$0xff]
    %v155 = vld [vmem:[#allocation5 + $0xe8] sm:$0xff]
    %v156 = vld [vmem:[#allocation5 + $0xf0] sm:$0xff]
    %v157 = vld [vmem:[#allocation5 + $0xf8] sm:$0xff]
    %158 = vmatprep.subr.mxu0 0.0
    %159 = vmatpush1.msra.mxu0 %v141
    %160 = vmatprep.subr.mxu0 0.0
    %161 = vmatpush1.msra.mxu0 %v140
    %162 = vmatprep.subr.mxu0 0.0
    %163 = vmatpush1.msra.mxu0 %v139
    %164 = vmatprep.subr.mxu0 0.0
    %165 = vmatpush1.msra.mxu0 %v138
    %166 = vmatprep.subr.mxu0 0.0
    %167 = vmatpush1.msra.mxu0 %v137
    %168 = vmatprep.subr.mxu0 0.0
    %169 = vmatpush1.msra.mxu0 %v136
    %170 = vmatprep.subr.mxu0 0.0
    %171 = vmatpush1.msra.mxu0 %v135
    %172 = vmatprep.subr.mxu0 0.0
    %173 = vmatpush1.msra.mxu0 %v134
    %174 = vmatprep.subr.mxu0 0.0
    %175 = vmatpush1.msra.mxu0 %v133
    %176 = vmatprep.subr.mxu0 0.0
    %177 = vmatpush1.msra.mxu0 %v132
    %178 = vmatprep.subr.mxu0 0.0
    %179 = vmatpush1.msra.mxu0 %v131
    %180 = vmatprep.subr.mxu0 0.0
    %181 = vmatpush1.msra.mxu0 %v130
    %182 = vmatprep.subr.mxu0 0.0
    %183 = vmatpush1.msra.mxu0 %v129
    %184 = vmatprep.subr.mxu0 0.0
    %185 = vmatpush1.msra.mxu0 %v128
    %186 = vmatprep.subr.mxu0 0.0
    %187 = vmatpush1.msra.mxu0 %v127
    %188 = vmatprep.subr.mxu0 0.0
    %189 = vmatpush1.msra.mxu0 %v126
    %190 = vmatprep.subr.mxu0 0.0
    %191 = vmatpush2.msra.mxu0 %v157
    %192 = vmatprep.subr.mxu0 0.0
    %193 = vmatpush2.msra.mxu0 %v156
    %194 = vmatprep.subr.mxu0 0.0
    %195 = vmatpush2.msra.mxu0 %v155
    %196 = vmatprep.subr.mxu0 0.0
    %197 = vmatpush2.msra.mxu0 %v154
    %198 = vmatprep.subr.mxu0 0.0
    %199 = vmatpush2.msra.mxu0 %v153
    %200 = vmatprep.subr.mxu0 0.0
    %201 = vmatpush2.msra.mxu0 %v152
    %202 = vmatprep.subr.mxu0 0.0
    %203 = vmatpush2.msra.mxu0 %v151
    %204 = vmatprep.subr.mxu0 0.0
    %205 = vmatpush2.msra.mxu0 %v150
    %206 = vmatprep.subr.mxu0 0.0
    %207 = vmatpush2.msra.mxu0 %v149
    %208 = vmatprep.subr.mxu0 0.0
    %209 = vmatpush2.msra.mxu0 %v148
    %210 = vmatprep.subr.mxu0 0.0
    %211 = vmatpush2.msra.mxu0 %v147
    %212 = vmatprep.subr.mxu0 0.0
    %213 = vmatpush2.msra.mxu0 %v146
    %214 = vmatprep.subr.mxu0 0.0
    %215 = vmatpush2.msra.mxu0 %v145
    %216 = vmatprep.subr.mxu0 0.0
    %217 = vmatpush2.msra.mxu0 %v144
    %218 = vmatprep.subr.mxu0 0.0
    %219 = vmatpush2.msra.mxu0 %v143
    %220 = vmatprep.subr.mxu0 0.0
    %221 = vmatpush2.msra.mxu0 %v142
    %222 = vmatprep.mubr.f32.mxu0 %v63
    %223 = vmatmul.mubr.f32.gmra.mxu0 %v62
    %v224 = vpop.f32.mrf.mxu0
    %v225 = vadd.f32 0.0, %v224
    %v226 = vpop.f32.mrf.mxu0
    %227 = vmatprep.mubr.f32.mxu0 %v65
    %228 = vmatmul.mubr.f32.gmra.mxu0 %v64
    %v229 = vpop.f32.mrf.mxu0
    %v230 = vadd.f32 0.0, %v229
    %v231 = vpop.f32.mrf.mxu0
    %232 = vmatprep.mubr.f32.mxu0 %v67
    %233 = vmatmul.mubr.f32.gmra.mxu0 %v66
    %v234 = vpop.f32.mrf.mxu0
    %v235 = vadd.f32 0.0, %v234
    %v236 = vpop.f32.mrf.mxu0
    %237 = vmatprep.mubr.f32.mxu0 %v69
    %238 = vmatmul.mubr.f32.gmra.mxu0 %v68
    %v239 = vpop.f32.mrf.mxu0
    %v240 = vadd.f32 0.0, %v239
    %v241 = vpop.f32.mrf.mxu0
    %242 = vmatprep.mubr.f32.mxu0 %v71
    %243 = vmatmul.mubr.f32.gmra.mxu0 %v70
    %v244 = vpop.f32.mrf.mxu0
    %v245 = vadd.f32 0.0, %v244
    %v246 = vpop.f32.mrf.mxu0
    %247 = vmatprep.mubr.f32.mxu0 %v73
    %248 = vmatmul.mubr.f32.gmra.mxu0 %v72
    %v249 = vpop.f32.mrf.mxu0
    %v250 = vadd.f32 0.0, %v249
    %v251 = vpop.f32.mrf.mxu0
    %252 = vmatprep.mubr.f32.mxu0 %v75
    %253 = vmatmul.mubr.f32.gmra.mxu0 %v74
    %v254 = vpop.f32.mrf.mxu0
    %v255 = vadd.f32 0.0, %v254
    %v256 = vpop.f32.mrf.mxu0
    %257 = vmatprep.mubr.f32.mxu0 %v77
    %258 = vmatmul.mubr.f32.gmra.mxu0 %v76
    %v259 = vpop.f32.mrf.mxu0
    %v260 = vadd.f32 0.0, %v259
    %v261 = vpop.f32.mrf.mxu0
    %262 = vmatprep.mubr.f32.mxu0 %v79
    %263 = vmatmul.mubr.f32.gmra.mxu0 %v78
    %v264 = vpop.f32.mrf.mxu0
    %v265 = vadd.f32 0.0, %v264
    %v266 = vpop.f32.mrf.mxu0
    %267 = vmatprep.mubr.f32.mxu0 %v81
    %268 = vmatmul.mubr.f32.gmra.mxu0 %v80
    %v269 = vpop.f32.mrf.mxu0
    %v270 = vadd.f32 0.0, %v269
    %v271 = vpop.f32.mrf.mxu0
    %272 = vmatprep.mubr.f32.mxu0 %v83
    %273 = vmatmul.mubr.f32.gmra.mxu0 %v82
    %v274 = vpop.f32.mrf.mxu0
    %v275 = vadd.f32 0.0, %v274
    %v276 = vpop.f32.mrf.mxu0
    %277 = vmatprep.mubr.f32.mxu0 %v85
    %278 = vmatmul.mubr.f32.gmra.mxu0 %v84
    %v279 = vpop.f32.mrf.mxu0
    %v280 = vadd.f32 0.0, %v279
    %v281 = vpop.f32.mrf.mxu0
    %282 = vmatprep.mubr.f32.mxu0 %v87
    %283 = vmatmul.mubr.f32.gmra.mxu0 %v86
    %v284 = vpop.f32.mrf.mxu0
    %v285 = vadd.f32 0.0, %v284
    %v286 = vpop.f32.mrf.mxu0
    %287 = vmatprep.mubr.f32.mxu0 %v89
    %288 = vmatmul.mubr.f32.gmra.mxu0 %v88
    %v289 = vpop.f32.mrf.mxu0
    %v290 = vadd.f32 0.0, %v289
    %v291 = vpop.f32.mrf.mxu0
    %292 = vmatprep.mubr.f32.mxu0 %v91
    %293 = vmatmul.mubr.f32.gmra.mxu0 %v90
    %v294 = vpop.f32.mrf.mxu0
    %v295 = vadd.f32 0.0, %v294
    %v296 = vpop.f32.mrf.mxu0
    %297 = vmatprep.mubr.f32.mxu0 %v93
    %298 = vmatmul.mubr.f32.gmra.mxu0 %v92
    %v299 = vpop.f32.mrf.mxu0
    %v300 = vadd.f32 0.0, %v299
    %v301 = vpop.f32.mrf.mxu0
    %302 = vmatprep.mubr.f32.mxu0 %v95
    %303 = vmatmul.mubr.f32.gmra.mxu0 %v94
    %v304 = vpop.f32.mrf.mxu0
    %v305 = vadd.f32 0.0, %v304
    %v306 = vpop.f32.mrf.mxu0
    %307 = vmatprep.mubr.f32.mxu0 %v97
    %308 = vmatmul.mubr.f32.gmra.mxu0 %v96
    %v309 = vpop.f32.mrf.mxu0
    %v310 = vadd.f32 0.0, %v309
    %v311 = vpop.f32.mrf.mxu0
    %312 = vmatprep.mubr.f32.mxu0 %v99
    %313 = vmatmul.mubr.f32.gmra.mxu0 %v98
    %v314 = vpop.f32.mrf.mxu0
    %v315 = vadd.f32 0.0, %v314
    %v316 = vpop.f32.mrf.mxu0
    %317 = vmatprep.mubr.f32.mxu0 %v101
    %318 = vmatmul.mubr.f32.gmra.mxu0 %v100
    %v319 = vpop.f32.mrf.mxu0
    %v320 = vadd.f32 0.0, %v319
    %v321 = vpop.f32.mrf.mxu0
    %322 = vmatprep.mubr.f32.mxu0 %v103
    %323 = vmatmul.mubr.f32.gmra.mxu0 %v102
    %v324 = vpop.f32.mrf.mxu0
    %v325 = vadd.f32 0.0, %v324
    %v326 = vpop.f32.mrf.mxu0
    %327 = vmatprep.mubr.f32.mxu0 %v105
    %328 = vmatmul.mubr.f32.gmra.mxu0 %v104
    %v329 = vpop.f32.mrf.mxu0
    %v330 = vadd.f32 0.0, %v329
    %v331 = vpop.f32.mrf.mxu0
    %332 = vmatprep.mubr.f32.mxu0 %v107
    %333 = vmatmul.mubr.f32.gmra.mxu0 %v106
    %v334 = vpop.f32.mrf.mxu0
    %v335 = vadd.f32 0.0, %v334
    %v336 = vpop.f32.mrf.mxu0
    %337 = vmatprep.mubr.f32.mxu0 %v109
    %338 = vmatmul.mubr.f32.gmra.mxu0 %v108
    %v339 = vpop.f32.mrf.mxu0
    %v340 = vadd.f32 0.0, %v339
    %v341 = vpop.f32.mrf.mxu0
    %342 = vmatprep.mubr.f32.mxu0 %v111
    %343 = vmatmul.mubr.f32.gmra.mxu0 %v110
    %v344 = vpop.f32.mrf.mxu0
    %v345 = vadd.f32 0.0, %v344
    %v346 = vpop.f32.mrf.mxu0
    %347 = vmatprep.mubr.f32.mxu0 %v113
    %348 = vmatmul.mubr.f32.gmra.mxu0 %v112
    %v349 = vpop.f32.mrf.mxu0
    %v350 = vadd.f32 0.0, %v349
    %v351 = vpop.f32.mrf.mxu0
    %352 = vmatprep.mubr.f32.mxu0 %v115
    %353 = vmatmul.mubr.f32.gmra.mxu0 %v114
    %v354 = vpop.f32.mrf.mxu0
    %v355 = vadd.f32 0.0, %v354
    %v356 = vpop.f32.mrf.mxu0
    %357 = vmatprep.mubr.f32.mxu0 %v117
    %358 = vmatmul.mubr.f32.gmra.mxu0 %v116
    %v359 = vpop.f32.mrf.mxu0
    %v360 = vadd.f32 0.0, %v359
    %v361 = vpop.f32.mrf.mxu0
    %362 = vmatprep.mubr.f32.mxu0 %v119
    %363 = vmatmul.mubr.f32.gmra.mxu0 %v118
    %v364 = vpop.f32.mrf.mxu0
    %v365 = vadd.f32 0.0, %v364
    %v366 = vpop.f32.mrf.mxu0
    %367 = vmatprep.mubr.f32.mxu0 %v121
    %368 = vmatmul.mubr.f32.gmra.mxu0 %v120
    %v369 = vpop.f32.mrf.mxu0
    %v370 = vadd.f32 0.0, %v369
    %v371 = vpop.f32.mrf.mxu0
    %372 = vmatprep.mubr.f32.mxu0 %v123
    %373 = vmatmul.mubr.f32.gmra.mxu0 %v122
    %v374 = vpop.f32.mrf.mxu0
    %v375 = vadd.f32 0.0, %v374
    %v376 = vpop.f32.mrf.mxu0
    %377 = vmatprep.mubr.f32.mxu0 %v125
    %378 = vmatmul.mubr.f32.gmra.mxu0 %v124
    %v379 = vpop.f32.mrf.mxu0
    %v380 = vadd.f32 0.0, %v379
    %v381 = vpop.f32.mrf.mxu0
    %382 = vdwg.mxu0
    %v383 = vld [vmem:[#allocation7] sm:$0xff]
    %v384 = vld [vmem:[#allocation7 + $0x8] sm:$0xff]
    %v385 = vld [vmem:[#allocation7 + $0x10] sm:$0xff]
    %v386 = vld [vmem:[#allocation7 + $0x18] sm:$0xff]
    %v387 = vld [vmem:[#allocation7 + $0x20] sm:$0xff]
    %v388 = vld [vmem:[#allocation7 + $0x28] sm:$0xff]
    %v389 = vld [vmem:[#allocation7 + $0x30] sm:$0xff]
    %v390 = vld [vmem:[#allocation7 + $0x38] sm:$0xff]
    %v391 = vld [vmem:[#allocation7 + $0x40] sm:$0xff]
    %v392 = vld [vmem:[#allocation7 + $0x48] sm:$0xff]
    %v393 = vld [vmem:[#allocation7 + $0x50] sm:$0xff]
    %v394 = vld [vmem:[#allocation7 + $0x58] sm:$0xff]
    %v395 = vld [vmem:[#allocation7 + $0x60] sm:$0xff]
    %v396 = vld [vmem:[#allocation7 + $0x68] sm:$0xff]
    %v397 = vld [vmem:[#allocation7 + $0x70] sm:$0xff]
    %v398 = vld [vmem:[#allocation7 + $0x78] sm:$0xff]
    %399 = vmatprep.subr.mxu0 0.0
    %400 = vmatpush1.msra.mxu0 %v398
    %401 = vmatprep.subr.mxu0 0.0
    %402 = vmatpush1.msra.mxu0 %v397
    %403 = vmatprep.subr.mxu0 0.0
    %404 = vmatpush1.msra.mxu0 %v396
    %405 = vmatprep.subr.mxu0 0.0
    %406 = vmatpush1.msra.mxu0 %v395
    %407 = vmatprep.subr.mxu0 0.0
    %408 = vmatpush1.msra.mxu0 %v394
    %409 = vmatprep.subr.mxu0 0.0
    %410 = vmatpush1.msra.mxu0 %v393
    %411 = vmatprep.subr.mxu0 0.0
    %412 = vmatpush1.msra.mxu0 %v392
    %413 = vmatprep.subr.mxu0 0.0
    %414 = vmatpush1.msra.mxu0 %v391
    %415 = vmatprep.subr.mxu0 0.0
    %416 = vmatpush1.msra.mxu0 %v390
    %417 = vmatprep.subr.mxu0 0.0
    %418 = vmatpush1.msra.mxu0 %v389
    %419 = vmatprep.subr.mxu0 0.0
    %420 = vmatpush1.msra.mxu0 %v388
    %421 = vmatprep.subr.mxu0 0.0
    %422 = vmatpush1.msra.mxu0 %v387
    %423 = vmatprep.subr.mxu0 0.0
    %424 = vmatpush1.msra.mxu0 %v386
    %425 = vmatprep.subr.mxu0 0.0
    %426 = vmatpush1.msra.mxu0 %v385
    %427 = vmatprep.subr.mxu0 0.0
    %428 = vmatpush1.msra.mxu0 %v384
    %429 = vmatprep.subr.mxu0 0.0
    %430 = vmatpush1.msra.mxu0 %v383
    %431 = vmatprep.subr.mxu0 0.0
    %432 = vmatpush2.msra.mxu0 0.0
    %433 = vmatprep.subr.mxu0 0.0
    %434 = vmatpush2.msra.mxu0 0.0
    %435 = vmatprep.subr.mxu0 0.0
    %436 = vmatpush2.msra.mxu0 0.0
    %437 = vmatprep.subr.mxu0 0.0
    %438 = vmatpush2.msra.mxu0 0.0
    %439 = vmatprep.subr.mxu0 0.0
    %440 = vmatpush2.msra.mxu0 0.0
    %441 = vmatprep.subr.mxu0 0.0
    %442 = vmatpush2.msra.mxu0 0.0
    %443 = vmatprep.subr.mxu0 0.0
    %444 = vmatpush2.msra.mxu0 0.0
    %445 = vmatprep.subr.mxu0 0.0
    %446 = vmatpush2.msra.mxu0 0.0
    %447 = vmatprep.subr.mxu0 0.0
    %448 = vmatpush2.msra.mxu0 0.0
    %449 = vmatprep.subr.mxu0 0.0
    %450 = vmatpush2.msra.mxu0 0.0
    %451 = vmatprep.subr.mxu0 0.0
    %452 = vmatpush2.msra.mxu0 0.0
    %453 = vmatprep.subr.mxu0 0.0
    %454 = vmatpush2.msra.mxu0 0.0
    %455 = vmatprep.subr.mxu0 0.0
    %456 = vmatpush2.msra.mxu0 0.0
    %457 = vmatprep.subr.mxu0 0.0
    %458 = vmatpush2.msra.mxu0 0.0
    %459 = vmatprep.subr.mxu0 0.0
    %460 = vmatpush2.msra.mxu0 0.0
    %461 = vmatprep.subr.mxu0 0.0
    %462 = vmatpush2.msra.mxu0 0.0
    %463 = vmatprep.mubr.f32.mxu0 0.0
    %464 = vmatmul.mubr.f32.gmra.mxu0 %v225
    %v465 = vpop.f32.mrf.mxu0
    %v466 = vadd.f32 0.0, %v465
    %v467 = vpop.f32.mrf.mxu0
    %468 = vmatprep.mubr.f32.mxu0 0.0
    %469 = vmatmul.mubr.f32.gmra.mxu0 %v230
    %v470 = vpop.f32.mrf.mxu0
    %v471 = vadd.f32 0.0, %v470
    %v472 = vpop.f32.mrf.mxu0
    %473 = vmatprep.mubr.f32.mxu0 0.0
    %474 = vmatmul.mubr.f32.gmra.mxu0 %v235
    %v475 = vpop.f32.mrf.mxu0
    %v476 = vadd.f32 0.0, %v475
    %v477 = vpop.f32.mrf.mxu0
    %478 = vmatprep.mubr.f32.mxu0 0.0
    %479 = vmatmul.mubr.f32.gmra.mxu0 %v240
    %v480 = vpop.f32.mrf.mxu0
    %v481 = vadd.f32 0.0, %v480
    %v482 = vpop.f32.mrf.mxu0
    %483 = vmatprep.mubr.f32.mxu0 0.0
    %484 = vmatmul.mubr.f32.gmra.mxu0 %v245
    %v485 = vpop.f32.mrf.mxu0
    %v486 = vadd.f32 0.0, %v485
    %v487 = vpop.f32.mrf.mxu0
    %488 = vmatprep.mubr.f32.mxu0 0.0
    %489 = vmatmul.mubr.f32.gmra.mxu0 %v250
    %v490 = vpop.f32.mrf.mxu0
    %v491 = vadd.f32 0.0, %v490
    %v492 = vpop.f32.mrf.mxu0
    %493 = vmatprep.mubr.f32.mxu0 0.0
    %494 = vmatmul.mubr.f32.gmra.mxu0 %v255
    %v495 = vpop.f32.mrf.mxu0
    %v496 = vadd.f32 0.0, %v495
    %v497 = vpop.f32.mrf.mxu0
    %498 = vmatprep.mubr.f32.mxu0 0.0
    %499 = vmatmul.mubr.f32.gmra.mxu0 %v260
    %v500 = vpop.f32.mrf.mxu0
    %v501 = vadd.f32 0.0, %v500
    %v502 = vpop.f32.mrf.mxu0
    %503 = vmatprep.mubr.f32.mxu0 0.0
    %504 = vmatmul.mubr.f32.gmra.mxu0 %v265
    %v505 = vpop.f32.mrf.mxu0
    %v506 = vadd.f32 0.0, %v505
    %v507 = vpop.f32.mrf.mxu0
    %508 = vmatprep.mubr.f32.mxu0 0.0
    %509 = vmatmul.mubr.f32.gmra.mxu0 %v270
    %v510 = vpop.f32.mrf.mxu0
    %v511 = vadd.f32 0.0, %v510
    %v512 = vpop.f32.mrf.mxu0
    %513 = vmatprep.mubr.f32.mxu0 0.0
    %514 = vmatmul.mubr.f32.gmra.mxu0 %v275
    %v515 = vpop.f32.mrf.mxu0
    %v516 = vadd.f32 0.0, %v515
    %v517 = vpop.f32.mrf.mxu0
    %518 = vmatprep.mubr.f32.mxu0 0.0
    %519 = vmatmul.mubr.f32.gmra.mxu0 %v280
    %v520 = vpop.f32.mrf.mxu0
    %v521 = vadd.f32 0.0, %v520
    %v522 = vpop.f32.mrf.mxu0
    %523 = vmatprep.mubr.f32.mxu0 0.0
    %524 = vmatmul.mubr.f32.gmra.mxu0 %v285
    %v525 = vpop.f32.mrf.mxu0
    %v526 = vadd.f32 0.0, %v525
    %v527 = vpop.f32.mrf.mxu0
    %528 = vmatprep.mubr.f32.mxu0 0.0
    %529 = vmatmul.mubr.f32.gmra.mxu0 %v290
    %v530 = vpop.f32.mrf.mxu0
    %v531 = vadd.f32 0.0, %v530
    %v532 = vpop.f32.mrf.mxu0
    %533 = vmatprep.mubr.f32.mxu0 0.0
    %534 = vmatmul.mubr.f32.gmra.mxu0 %v295
    %v535 = vpop.f32.mrf.mxu0
    %v536 = vadd.f32 0.0, %v535
    %v537 = vpop.f32.mrf.mxu0
    %538 = vmatprep.mubr.f32.mxu0 0.0
    %539 = vmatmul.mubr.f32.gmra.mxu0 %v300
    %v540 = vpop.f32.mrf.mxu0
    %v541 = vadd.f32 0.0, %v540
    %v542 = vpop.f32.mrf.mxu0
    %543 = vmatprep.mubr.f32.mxu0 0.0
    %544 = vmatmul.mubr.f32.gmra.mxu0 %v305
    %v545 = vpop.f32.mrf.mxu0
    %v546 = vadd.f32 0.0, %v545
    %v547 = vpop.f32.mrf.mxu0
    %548 = vmatprep.mubr.f32.mxu0 0.0
    %549 = vmatmul.mubr.f32.gmra.mxu0 %v310
    %v550 = vpop.f32.mrf.mxu0
    %v551 = vadd.f32 0.0, %v550
    %v552 = vpop.f32.mrf.mxu0
    %553 = vmatprep.mubr.f32.mxu0 0.0
    %554 = vmatmul.mubr.f32.gmra.mxu0 %v315
    %v555 = vpop.f32.mrf.mxu0
    %v556 = vadd.f32 0.0, %v555
    %v557 = vpop.f32.mrf.mxu0
    %558 = vmatprep.mubr.f32.mxu0 0.0
    %559 = vmatmul.mubr.f32.gmra.mxu0 %v320
    %v560 = vpop.f32.mrf.mxu0
    %v561 = vadd.f32 0.0, %v560
    %v562 = vpop.f32.mrf.mxu0
    %563 = vmatprep.mubr.f32.mxu0 0.0
    %564 = vmatmul.mubr.f32.gmra.mxu0 %v325
    %v565 = vpop.f32.mrf.mxu0
    %v566 = vadd.f32 0.0, %v565
    %v567 = vpop.f32.mrf.mxu0
    %568 = vmatprep.mubr.f32.mxu0 0.0
    %569 = vmatmul.mubr.f32.gmra.mxu0 %v330
    %v570 = vpop.f32.mrf.mxu0
    %v571 = vadd.f32 0.0, %v570
    %v572 = vpop.f32.mrf.mxu0
    %573 = vmatprep.mubr.f32.mxu0 0.0
    %574 = vmatmul.mubr.f32.gmra.mxu0 %v335
    %v575 = vpop.f32.mrf.mxu0
    %v576 = vadd.f32 0.0, %v575
    %v577 = vpop.f32.mrf.mxu0
    %578 = vmatprep.mubr.f32.mxu0 0.0
    %579 = vmatmul.mubr.f32.gmra.mxu0 %v340
    %v580 = vpop.f32.mrf.mxu0
    %v581 = vadd.f32 0.0, %v580
    %v582 = vpop.f32.mrf.mxu0
    %583 = vmatprep.mubr.f32.mxu0 0.0
    %584 = vmatmul.mubr.f32.gmra.mxu0 %v345
    %v585 = vpop.f32.mrf.mxu0
    %v586 = vadd.f32 0.0, %v585
    %v587 = vpop.f32.mrf.mxu0
    %588 = vmatprep.mubr.f32.mxu0 0.0
    %589 = vmatmul.mubr.f32.gmra.mxu0 %v350
    %v590 = vpop.f32.mrf.mxu0
    %v591 = vadd.f32 0.0, %v590
    %v592 = vpop.f32.mrf.mxu0
    %593 = vmatprep.mubr.f32.mxu0 0.0
    %594 = vmatmul.mubr.f32.gmra.mxu0 %v355
    %v595 = vpop.f32.mrf.mxu0
    %v596 = vadd.f32 0.0, %v595
    %v597 = vpop.f32.mrf.mxu0
    %598 = vmatprep.mubr.f32.mxu0 0.0
    %599 = vmatmul.mubr.f32.gmra.mxu0 %v360
    %v600 = vpop.f32.mrf.mxu0
    %v601 = vadd.f32 0.0, %v600
    %v602 = vpop.f32.mrf.mxu0
    %603 = vmatprep.mubr.f32.mxu0 0.0
    %604 = vmatmul.mubr.f32.gmra.mxu0 %v365
    %v605 = vpop.f32.mrf.mxu0
    %v606 = vadd.f32 0.0, %v605
    %v607 = vpop.f32.mrf.mxu0
    %608 = vmatprep.mubr.f32.mxu0 0.0
    %609 = vmatmul.mubr.f32.gmra.mxu0 %v370
    %v610 = vpop.f32.mrf.mxu0
    %v611 = vadd.f32 0.0, %v610
    %v612 = vpop.f32.mrf.mxu0
    %613 = vmatprep.mubr.f32.mxu0 0.0
    %614 = vmatmul.mubr.f32.gmra.mxu0 %v375
    %v615 = vpop.f32.mrf.mxu0
    %v616 = vadd.f32 0.0, %v615
    %v617 = vpop.f32.mrf.mxu0
    %618 = vmatprep.mubr.f32.mxu0 0.0
    %619 = vmatmul.mubr.f32.gmra.mxu0 %v380
    %v620 = vpop.f32.mrf.mxu0
    %v621 = vadd.f32 0.0, %v620
    %v622 = vpop.f32.mrf.mxu0
    %623 = vdwg.mxu0
    %v624 = vadd.f32 %v466, %v471
    %v625 = vadd.f32 %v624, %v476
    %v626 = vadd.f32 %v625, %v481
    %v627 = vadd.f32 %v626, %v486
    %v628 = vadd.f32 %v627, %v491
    %v629 = vadd.f32 %v628, %v496
    %v630 = vadd.f32 %v629, %v501
    %v631 = vadd.f32 %v630, %v506
    %v632 = vadd.f32 %v631, %v511
    %v633 = vadd.f32 %v632, %v516
    %v634 = vadd.f32 %v633, %v521
    %v635 = vadd.f32 %v634, %v526
    %v636 = vadd.f32 %v635, %v531
    %v637 = vadd.f32 %v636, %v536
    %v638 = vadd.f32 %v637, %v541
    %v639 = vadd.f32 %v638, %v546
    %v640 = vadd.f32 %v639, %v551
    %v641 = vadd.f32 %v640, %v556
    %v642 = vadd.f32 %v641, %v561
    %v643 = vadd.f32 %v642, %v566
    %v644 = vadd.f32 %v643, %v571
    %v645 = vadd.f32 %v644, %v576
    %v646 = vadd.f32 %v645, %v581
    %v647 = vadd.f32 %v646, %v586
    %v648 = vadd.f32 %v647, %v591
    %v649 = vadd.f32 %v648, %v596
    %v650 = vadd.f32 %v649, %v601
    %v651 = vadd.f32 %v650, %v606
    %v652 = vadd.f32 %v651, %v611
    %v653 = vadd.f32 %v652, %v616
    %v654 = vadd.f32 %v653, %v621
    %v655 = vrot.slane %v654, 4
    %v656 = vadd.f32 %v654, %v655
    %v657 = vrot.slane %v656, 2
    %v658 = vadd.f32 %v656, %v657
    %v659 = vrot.slane %v658, 1
    %v660 = vadd.f32 %v658, %v659
    %v661 = vmul.f32 %v466, %v466
    %v662 = vmul.f32 %v471, %v471
    %v663 = vmul.f32 %v476, %v476
    %v664 = vmul.f32 %v481, %v481
    %v665 = vmul.f32 %v486, %v486
    %v666 = vmul.f32 %v491, %v491
    %v667 = vmul.f32 %v496, %v496
    %v668 = vmul.f32 %v501, %v501
    %v669 = vmul.f32 %v506, %v506
    %v670 = vmul.f32 %v511, %v511
    %v671 = vmul.f32 %v516, %v516
    %v672 = vmul.f32 %v521, %v521
    %v673 = vmul.f32 %v526, %v526
    %v674 = vmul.f32 %v531, %v531
    %v675 = vmul.f32 %v536, %v536
    %v676 = vmul.f32 %v541, %v541
    %v677 = vmul.f32 %v546, %v546
    %v678 = vmul.f32 %v551, %v551
    %v679 = vmul.f32 %v556, %v556
    %v680 = vmul.f32 %v561, %v561
    %v681 = vmul.f32 %v566, %v566
    %v682 = vmul.f32 %v571, %v571
    %v683 = vmul.f32 %v576, %v576
    %v684 = vmul.f32 %v581, %v581
    %v685 = vmul.f32 %v586, %v586
    %v686 = vmul.f32 %v591, %v591
    %v687 = vmul.f32 %v596, %v596
    %v688 = vmul.f32 %v601, %v601
    %v689 = vmul.f32 %v606, %v606
    %v690 = vmul.f32 %v611, %v611
    %v691 = vmul.f32 %v616, %v616
    %v692 = vmul.f32 %v621, %v621
    %v693 = vadd.f32 %v661, %v662
    %v694 = vadd.f32 %v693, %v663
    %v695 = vadd.f32 %v694, %v664
    %v696 = vadd.f32 %v695, %v665
    %v697 = vadd.f32 %v696, %v666
    %v698 = vadd.f32 %v697, %v667
    %v699 = vadd.f32 %v698, %v668
    %v700 = vadd.f32 %v699, %v669
    %v701 = vadd.f32 %v700, %v670
    %v702 = vadd.f32 %v701, %v671
    %v703 = vadd.f32 %v702, %v672
    %v704 = vadd.f32 %v703, %v673
    %v705 = vadd.f32 %v704, %v674
    %v706 = vadd.f32 %v705, %v675
    %v707 = vadd.f32 %v706, %v676
    %v708 = vadd.f32 %v707, %v677
    %v709 = vadd.f32 %v708, %v678
    %v710 = vadd.f32 %v709, %v679
    %v711 = vadd.f32 %v710, %v680
    %v712 = vadd.f32 %v711, %v681
    %v713 = vadd.f32 %v712, %v682
    %v714 = vadd.f32 %v713, %v683
    %v715 = vadd.f32 %v714, %v684
    %v716 = vadd.f32 %v715, %v685
    %v717 = vadd.f32 %v716, %v686
    %v718 = vadd.f32 %v717, %v687
    %v719 = vadd.f32 %v718, %v688
    %v720 = vadd.f32 %v719, %v689
    %v721 = vadd.f32 %v720, %v690
    %v722 = vadd.f32 %v721, %v691
    %v723 = vadd.f32 %v722, %v692
    %v724 = vrot.slane %v723, 4
    %v725 = vadd.f32 %v723, %v724
    %v726 = vrot.slane %v725, 2
    %v727 = vadd.f32 %v725, %v726
    %v728 = vrot.slane %v727, 1
    %v729 = vadd.f32 %v727, %v728
    %v730 = vrcp.pop 256.0
    %v731 = vmul.f32 %v660, %v730
    %v732 = vmul.f32 %v729, %v730
    %v733 = vmul.f32 %v731, %v731
    %v734 = vsub.f32 %v732, %v733
    %v735 = vmax.f32 %v734, 0.0
    %v736 = vld [vmem:[%s3] sm:$0x1]
    %v737 = vadd.f32 %v735, 1e-05
    %v738 = vrsqrt.pop %v737
    %v739 = vmul.f32 %v736, %v738
    %v740 = vld [vmem:[%s4] sm:$0x1]
    %v741 = vmul.f32 %v731, %v739
    %v742 = vsub.f32 %v740, %v741
    %v744 = vlaneseq
    %v745 = vshrl.u32 %v744, 7
    %v746 = vsub.s32 0, %v745
    %v747 = vrot.slane %v739, %v746
    %v749 = vmul.f32 %v466, %v747
    %v750 = vmul.f32 %v471, %v747
    %v751 = vmul.f32 %v476, %v747
    %v752 = vmul.f32 %v481, %v747
    %v753 = vmul.f32 %v486, %v747
    %v754 = vmul.f32 %v491, %v747
    %v755 = vmul.f32 %v496, %v747
    %v756 = vmul.f32 %v501, %v747
    %v757 = vmul.f32 %v506, %v747
    %v758 = vmul.f32 %v511, %v747
    %v759 = vmul.f32 %v516, %v747
    %v760 = vmul.f32 %v521, %v747
    %v761 = vmul.f32 %v526, %v747
    %v762 = vmul.f32 %v531, %v747
    %v763 = vmul.f32 %v536, %v747
    %v764 = vmul.f32 %v541, %v747
    %v765 = vmul.f32 %v546, %v747
    %v766 = vmul.f32 %v551, %v747
    %v767 = vmul.f32 %v556, %v747
    %v768 = vmul.f32 %v561, %v747
    %v769 = vmul.f32 %v566, %v747
    %v770 = vmul.f32 %v571, %v747
    %v771 = vmul.f32 %v576, %v747
    %v772 = vmul.f32 %v581, %v747
    %v773 = vmul.f32 %v586, %v747
    %v774 = vmul.f32 %v591, %v747
    %v775 = vmul.f32 %v596, %v747
    %v776 = vmul.f32 %v601, %v747
    %v777 = vmul.f32 %v606, %v747
    %v778 = vmul.f32 %v611, %v747
    %v779 = vmul.f32 %v616, %v747
    %v780 = vmul.f32 %v621, %v747
    %v782 = vlaneseq
    %v783 = vshrl.u32 %v782, 7
    %v784 = vsub.s32 0, %v783
    %v785 = vrot.slane %v742, %v784
    %v787 = vadd.f32 %v749, %v785
    %v788 = vadd.f32 %v750, %v785
    %v789 = vadd.f32 %v751, %v785
    %v790 = vadd.f32 %v752, %v785
    %v791 = vadd.f32 %v753, %v785
    %v792 = vadd.f32 %v754, %v785
    %v793 = vadd.f32 %v755, %v785
    %v794 = vadd.f32 %v756, %v785
    %v795 = vadd.f32 %v757, %v785
    %v796 = vadd.f32 %v758, %v785
    %v797 = vadd.f32 %v759, %v785
    %v798 = vadd.f32 %v760, %v785
    %v799 = vadd.f32 %v761, %v785
    %v800 = vadd.f32 %v762, %v785
    %v801 = vadd.f32 %v763, %v785
    %v802 = vadd.f32 %v764, %v785
    %v803 = vadd.f32 %v765, %v785
    %v804 = vadd.f32 %v766, %v785
    %v805 = vadd.f32 %v767, %v785
    %v806 = vadd.f32 %v768, %v785
    %v807 = vadd.f32 %v769, %v785
    %v808 = vadd.f32 %v770, %v785
    %v809 = vadd.f32 %v771, %v785
    %v810 = vadd.f32 %v772, %v785
    %v811 = vadd.f32 %v773, %v785
    %v812 = vadd.f32 %v774, %v785
    %v813 = vadd.f32 %v775, %v785
    %v814 = vadd.f32 %v776, %v785
    %v815 = vadd.f32 %v777, %v785
    %v816 = vadd.f32 %v778, %v785
    %v817 = vadd.f32 %v779, %v785
    %v818 = vadd.f32 %v780, %v785
    %819 = vst [vmem:[#allocation8] sm:$0xff] %v787
    %820 = vst [vmem:[#allocation8 + $0x8] sm:$0xff] %v788
    %821 = vst [vmem:[#allocation8 + $0x10] sm:$0xff] %v789
    %822 = vst [vmem:[#allocation8 + $0x18] sm:$0xff] %v790
    %823 = vst [vmem:[#allocation8 + $0x20] sm:$0xff] %v791
    %824 = vst [vmem:[#allocation8 + $0x28] sm:$0xff] %v792
    %825 = vst [vmem:[#allocation8 + $0x30] sm:$0xff] %v793
    %826 = vst [vmem:[#allocation8 + $0x38] sm:$0xff] %v794
    %827 = vst [vmem:[#allocation8 + $0x40] sm:$0xff] %v795
    %828 = vst [vmem:[#allocation8 + $0x48] sm:$0xff] %v796
    %829 = vst [vmem:[#allocation8 + $0x50] sm:$0xff] %v797
    %830 = vst [vmem:[#allocation8 + $0x58] sm:$0xff] %v798
    %831 = vst [vmem:[#allocation8 + $0x60] sm:$0xff] %v799
    %832 = vst [vmem:[#allocation8 + $0x68] sm:$0xff] %v800
    %833 = vst [vmem:[#allocation8 + $0x70] sm:$0xff] %v801
    %834 = vst [vmem:[#allocation8 + $0x78] sm:$0xff] %v802
    %835 = vst [vmem:[#allocation8 + $0x80] sm:$0xff] %v803
    %836 = vst [vmem:[#allocation8 + $0x88] sm:$0xff] %v804
    %837 = vst [vmem:[#allocation8 + $0x90] sm:$0xff] %v805
    %838 = vst [vmem:[#allocation8 + $0x98] sm:$0xff] %v806
    %839 = vst [vmem:[#allocation8 + $0xa0] sm:$0xff] %v807
    %840 = vst [vmem:[#allocation8 + $0xa8] sm:$0xff] %v808
    %841 = vst [vmem:[#allocation8 + $0xb0] sm:$0xff] %v809
    %842 = vst [vmem:[#allocation8 + $0xb8] sm:$0xff] %v810
    %843 = vst [vmem:[#allocation8 + $0xc0] sm:$0xff] %v811
    %844 = vst [vmem:[#allocation8 + $0xc8] sm:$0xff] %v812
    %845 = vst [vmem:[#allocation8 + $0xd0] sm:$0xff] %v813
    %846 = vst [vmem:[#allocation8 + $0xd8] sm:$0xff] %v814
    %847 = vst [vmem:[#allocation8 + $0xe0] sm:$0xff] %v815
    %848 = vst [vmem:[#allocation8 + $0xe8] sm:$0xff] %v816
    %849 = vst [vmem:[#allocation8 + $0xf0] sm:$0xff] %v817
    %850 = vst [vmem:[#allocation8 + $0xf8] sm:$0xff] %v818
    // Predicated region
    $region34: #{tpu_custom_call.1} parent=1 // pred_check
      _
    $region35: #{tpu_custom_call.1} parent=1 // pred_check_branch
      %852 = sbr.rel (0) target = $region37
    $region36: #{tpu_custom_call.1} parent=1 // pred_region
      %s854 = ssub.s32 4096, 4096
      %855 = vsyncadd [#allocation4], %s854
      %s856 = sshll.u32 [#allocation8], 4
      %s857 = int_to_ptr.vmem [resolvable:$true] %s856
      %862 = dma.vmem_to_hbm [thread:$0]  %s857, 4096, %s5, [#allocation4], 128, 128, 8
    $region37: #{tpu_custom_call.1} parent=1 // pred_fallthru
      _
    // Predicated region
    $region38: #{tpu_custom_call.1} parent=1 // pred_check
      _
    $region39: #{tpu_custom_call.1} parent=1 // pred_check_branch
      %864 = sbr.rel (0) target = $region41
    $region40: #{tpu_custom_call.1} parent=1 // pred_region
      %865 = dma.done [#allocation4], 4096
    $region41: #{tpu_custom_call.1} parent=1 // pred_fallthru
      _
    %866 = vsyncpa [#allocation3], 1
    %867 = vsyncpa [#allocation6], 1
    %868 = vsyncpa [#allocation4], 1

</llo_original>
